<compile_context>
chip_gen: v7x
topology: tpu7x:2x2x1
jax: 0.10.0
libtpu: 0.0.40
codegen_flags: <defaults>
</compile_context>

<pallas_src>
import math

import jax
import jax.numpy as jnp
from jax.experimental import pallas as pl
from jax.experimental.pallas import tpu as pltpu


def _round_up(x, m):
    return (x + m - 1) // m * m


def _block_spec(shape, index_map, buffers=None):
    """BlockSpec with optional explicit buffer count (graceful fallback)."""
    if buffers is not None:
        try:
            return pl.BlockSpec(shape, index_map, pipeline_mode=pl.Buffered(int(buffers)))
        except Exception:
            pass
    return pl.BlockSpec(shape, index_map)


def _vmem_cap_bytes():
    """Per-generation VMEM budget (~80% of physical; conservative fallback = v7x 64 MiB)."""
    try:
        phys = int(pltpu.get_tpu_info().vmem_capacity_bytes)
    except Exception:
        phys = 64 * 1024 * 1024
    return max(32 * 1024 * 1024, int(phys * 0.8))


# ----------------------------------------------------------------------------
# Kernels
# ----------------------------------------------------------------------------
def ffn_adapter_kernel(x_ref, w1_ref, b1_ref, w2_ref, b2_ref, o_ref):
    """Resident-weight path: fc1/fc2 weights live in VMEM; row tiles streamed."""
    x = x_ref[...]
    if x.dtype != w1_ref.dtype:          # optional bf16 MXU fast path (prepare-time choice)
        x = x.astype(w1_ref.dtype)
    h = jnp.dot(x, w1_ref[...], preferred_element_type=jnp.float32)
    h = jnp.maximum(h + b1_ref[...], 0.0)            # bias (pre-cast f32) + ReLU
    # TODO(synk): FairseqDropout is identity in eval mode; training dropout not implemented.
    out = jnp.dot(h.astype(w2_ref.dtype), w2_ref[...], preferred_element_type=jnp.float32)
    o_ref[...] = (out + b2_ref[...]).astype(o_ref.dtype)


def ffn_adapter_ktiled_kernel(x_ref, w1_ref, b1_ref, w2_ref, b2_ref, o_ref, acc_ref):
    """K-tiled fallback: grid axis over the hidden dim + f32 VMEM accumulator."""
    k = pl.program_id(1)

    @pl.when(k == 0)
    def _init():
        acc_ref[...] = jnp.zeros_like(acc_ref)

    x = x_ref[...]
    if x.dtype != w1_ref.dtype:
        x = x.astype(w1_ref.dtype)
    h = jnp.dot(x, w1_ref[...], preferred_element_type=jnp.float32)
    h = jnp.maximum(h + b1_ref[...], 0.0)
    acc_ref[...] += jnp.dot(h.astype(w2_ref.dtype), w2_ref[...],
                            preferred_element_type=jnp.float32)

    @pl.when(k == pl.num_programs(1) - 1)
    def _finalize():
        o_ref[...] = (acc_ref[...] + b2_ref[...]).astype(o_ref.dtype)


# ----------------------------------------------------------------------------
# Parameter preparation (done once, outside the per-forward path)
# ----------------------------------------------------------------------------
def prepare_ffn_adapter_params(w1, b1, w2, b2, *, compute_dtype=None):
    """Pad / cast FFN parameters once.

    w1: (C_in, H)  = fc1.weight.T     b1: (H,)
    w2: (H, C_out) = fc2.weight.T     b2: (C_out,)
    Hidden/output dims are zero-padded to multiples of 128 lanes (inert for the
    math); biases are stored as (1, dim) float32 rows so the kernel adds them
    without any per-tile cast.
    """
    C_in, H = w1.shape
    H2, C_out = w2.shape
    assert H2 == H and b1.shape == (H,) and b2.shape == (C_out,)
    H_p = _round_up(H, 128)
    C_out_p = _round_up(C_out, 128)
    w_dtype = compute_dtype if compute_dtype is not None else w1.dtype
    w1_p = jnp.pad(w1, ((0, 0), (0, H_p - H))).astype(w_dtype)
    w2_p = jnp.pad(w2, ((0, H_p - H), (0, C_out_p - C_out))).astype(w_dtype)
    b1_p = jnp.pad(b1.reshape(1, H), ((0, 0), (0, H_p - H))).astype(jnp.float32)
    b2_p = jnp.pad(b2.reshape(1, C_out), ((0, 0), (0, C_out_p - C_out))).astype(jnp.float32)
    return dict(w1=w1_p, b1=b1_p, w2=w2_p, b2=b2_p,
                c_in=C_in, hidden=H, c_out=C_out, h_pad=H_p, c_out_pad=C_out_p)


# ----------------------------------------------------------------------------
# Forward wrapper
# ----------------------------------------------------------------------------
def ffn_adapter(x, params, *, tile_n=1024, stream_buffers=2, force_ktiled=False):
    """x: [..., C_in] -> [..., C_out] computing fc2(relu(fc1(x)))."""
    C_in = params["c_in"]
    H, H_p = params["hidden"], params["h_pad"]
    C_out, C_out_p = params["c_out"], params["c_out_pad"]
    assert x.shape[-1] == C_in

    lead_shape = x.shape[:-1]
    N = math.prod(lead_shape) if lead_shape else 1
    x2d = x.reshape(N, C_in)
    dtype = x.dtype
    itemsize = jnp.dtype(dtype).itemsize
    w_itemsize = jnp.dtype(params["w1"].dtype).itemsize

    # Row tiles: multiple of the sublane granule; capped at ~ceil(N/2) so the
    # "parallel" axis has >=2 tiles for megacore whenever N allows it.
    row_align = 8 if itemsize >= 4 else 32 // itemsize
    half = _round_up(-(-N // 2), row_align)
    tn = max(row_align, min(_round_up(tile_n, row_align), half))

    cap = _vmem_cap_bytes()

    def resident_vmem(t):
        return ((C_in * H_p + H_p * C_out_p) * w_itemsize          # weights (Buffered(1))
                + (H_p + C_out_p) * 4                              # f32 biases
                + stream_buffers * t * (C_in + C_out_p) * itemsize  # streamed x / out tiles
                + t * H_p * (4 + itemsize)                         # f32 h + recast copy
                + t * C_out_p * 4)                                 # f32 out before cast

    while resident_vmem(tn) > cap and tn > row_align:
        tn = max(row_align, _round_up(tn // 2, row_align))
    use_resident = (not force_ktiled) and resident_vmem(tn) <= cap

    flops = 2 * N * (C_in * H + H * C_out)
    bytes_accessed = int(N * (C_in + C_out_p) * itemsize
                         + (C_in * H_p + H_p * C_out_p) * w_itemsize
                         + (H_p + C_out_p) * 4)
    try:
        cost = pl.CostEstimate(flops=flops, transcendentals=0,
                               bytes_accessed=bytes_accessed)
    except Exception:
        cost = None

    stream_bufs = None if stream_buffers == 2 else stream_buffers

    if use_resident:
        grid = (pl.cdiv(N, tn),)
        vmem_limit = int(min(cap, max(32 * 1024 * 1024,
                                      int(resident_vmem(tn) * 1.25) + (2 << 20))))
        out_p = pl.pallas_call(
            ffn_adapter_kernel,
            out_shape=jax.ShapeDtypeStruct((N, C_out_p), dtype),
            grid_spec=pltpu.PrefetchScalarGridSpec(
                num_scalar_prefetch=0,
                grid=grid,
                in_specs=[
                    _block_spec((tn, C_in), lambda i: (i, 0), stream_bufs),   # streamed x
                    _block_spec((C_in, H_p), lambda i: (0, 0), 1),            # resident w1
                    _block_spec((1, H_p), lambda i: (0, 0), 1),               # resident b1 (f32)
                    _block_spec((H_p, C_out_p), lambda i: (0, 0), 1),         # resident w2
                    _block_spec((1, C_out_p), lambda i: (0, 0), 1),           # resident b2 (f32)
                ],
                out_specs=_block_spec((tn, C_out_p), lambda i: (i, 0), stream_bufs),
            ),
            compiler_params=pltpu.CompilerParams(
                dimension_semantics=("parallel",),      # megacore sharding of row tiles
                vmem_limit_bytes=vmem_limit,
            ),
            cost_estimate=cost,
        )(x2d, params["w1"], params["b1"], params["w2"], params["b2"])
    else:
        # K-tiled fallback: hidden dim on an "arbitrary" grid axis, f32 accumulator.
        def ktiled_vmem(t, th_):
            return (stream_buffers * t * (C_in + C_out_p) * itemsize
                    + 2 * (C_in * th_ + th_ * C_out_p) * w_itemsize   # w1/w2 tiles, 2x buffered
                    + 2 * th_ * 4 + C_out_p * 4                       # bias tiles
                    + t * C_out_p * 4                                 # acc scratch
                    + t * th_ * (4 + itemsize))                       # f32 h + recast copy

        th = next(t for t in (1024, 512, 256, 128) if H_p % t == 0)
        while ktiled_vmem(tn, th) > cap and tn > row_align:
            tn = max(row_align, _round_up(tn // 2, row_align))
        while ktiled_vmem(tn, th) > cap and th > 128:
            th //= 2
        grid = (pl.cdiv(N, tn), H_p // th)
        vmem_limit = int(min(cap, max(32 * 1024 * 1024,
                                      int(ktiled_vmem(tn, th) * 1.25) + (2 << 20))))
        out_p = pl.pallas_call(
            ffn_adapter_ktiled_kernel,
            out_shape=jax.ShapeDtypeStruct((N, C_out_p), dtype),
            grid_spec=pltpu.PrefetchScalarGridSpec(
                num_scalar_prefetch=0,
                grid=grid,
                in_specs=[
                    _block_spec((tn, C_in), lambda i, k: (i, 0), stream_bufs),  # x (constant over k)
                    pl.BlockSpec((C_in, th), lambda i, k: (0, k)),              # w1 hidden tile
                    pl.BlockSpec((1, th), lambda i, k: (0, k)),                 # b1 hidden tile
                    pl.BlockSpec((th, C_out_p), lambda i, k: (k, 0)),           # w2 hidden tile
                    _block_spec((1, C_out_p), lambda i, k: (0, 0), 1),          # b2 resident
                ],
                out_specs=_block_spec((tn, C_out_p), lambda i, k: (i, 0), stream_bufs),
                scratch_shapes=[pltpu.VMEM((tn, C_out_p), jnp.float32)],
            ),
            compiler_params=pltpu.CompilerParams(
                dimension_semantics=("parallel", "arbitrary"),
                vmem_limit_bytes=vmem_limit,
            ),
            cost_estimate=cost,
        )(x2d, params["w1"], params["b1"], params["w2"], params["b2"])

    out2d = out_p if C_out_p == C_out else out_p[:, :C_out]
    return out2d.reshape(*lead_shape, C_out)


# ----------------------------------------------------------------------------
# Demo / self-test
# ----------------------------------------------------------------------------
def init_linear_params(key, fan_in, fan_out, dtype=jnp.float32):
    # torch.nn.Linear default init: U(-1/sqrt(fan_in), 1/sqrt(fan_in)).
    # Stored as (fan_in, fan_out) so the kernel computes x @ W (W = weight.T).
    kw, kb = jax.random.split(key)
    bound = 1.0 / jnp.sqrt(jnp.array(fan_in, dtype=dtype))
    w = jax.random.uniform(kw, (fan_in, fan_out), dtype, minval=-bound, maxval=bound)
    b = jax.random.uniform(kb, (fan_out,), dtype, minval=-bound, maxval=bound)
    return w, b


def _reference(x, w1, b1, w2, b2):
    h = jnp.maximum(x.reshape(-1, x.shape[-1]) @ w1 + b1, 0.0)
    return (h @ w2 + b2).reshape(*x.shape[:-1], w2.shape[1])


if __name__ == "__main__":
    key = jax.random.PRNGKey(0)
    k1, k2, k3, k4, k5, k6 = jax.random.split(key, 6)

    # --- small adapter-sized test (matches the module's intended use) -------
    B, T = 2, 8
    input_size, hidden_size, output_size = 32, 64, 32
    x = jax.random.normal(k1, (B, T, input_size), dtype=jnp.float32)
    w1, b1 = init_linear_params(k2, input_size, hidden_size)
    w2, b2 = init_linear_params(k3, hidden_size, output_size)
    params = prepare_ffn_adapter_params(w1, b1, w2, b2)

    out = jax.block_until_ready(ffn_adapter(x, params))
    ref = _reference(x, w1, b1, w2, b2)
    assert out.shape == (B, T, output_size)
    assert jnp.allclose(out, ref, atol=1e-5, rtol=1e-5)

    out_kt = jax.block_until_ready(ffn_adapter(x, params, force_ktiled=True))
    assert jnp.allclose(out_kt, ref, atol=1e-5, rtol=1e-5)

    # --- ragged-shape test: rows not a multiple of the tile, non-128 features,
    #     ragged C_out, and multiple hidden-dim tiles on the K-tiled path ------
    B2, T2 = 2, 12
    in2, hid2, out2_sz = 48, 384, 80
    x2 = jax.random.normal(k4, (B2, T2, in2), dtype=jnp.float32)
    w1b, b1b = init_linear_params(k5, in2, hid2)
    w2b, b2b = init_linear_params(k6, hid2, out2_sz)
    params2 = prepare_ffn_adapter_params(w1b, b1b, w2b, b2b)
    ref2 = _reference(x2, w1b, b1b, w2b, b2b)

    out2 = jax.block_until_ready(ffn_adapter(x2, params2))
    out2_kt = jax.block_until_ready(ffn_adapter(x2, params2, force_ktiled=True))
    assert out2.shape == (B2, T2, out2_sz)
    # looser tolerance: guards structure (masking / K accumulation), not matmul ulps
    assert jnp.allclose(out2, ref2, atol=2e-2, rtol=2e-2)
    assert jnp.allclose(out2_kt, ref2, atol=2e-2, rtol=2e-2)

    print("KERNEL_OK")
</pallas_src>

<mosaic_0001>
module attributes {stable_mosaic.version = 11 : i64} {
  func.func @ffn_adapter_kernel(%arg0: i32, %arg1: memref<8x32xf32, #tpu.memory_space<vmem>>, %arg2: memref<32x128xf32, #tpu.memory_space<vmem>>, %arg3: memref<1x128xf32, #tpu.memory_space<vmem>>, %arg4: memref<128x128xf32, #tpu.memory_space<vmem>>, %arg5: memref<1x128xf32, #tpu.memory_space<vmem>>, %arg6: memref<8x128xf32, #tpu.memory_space<vmem>>) attributes {dimension_semantics = [#tpu.dimension_semantics<parallel>], iteration_bounds = array<i64: 2>, scalar_prefetch = 0 : i64, scratch_operands = 0 : i64, tpu.core_type = #tpu.core_type<tc>, window_params = [{transform_indices = @transform_0, window_bounds = array<i64: 8, 32>}, {pipeline_mode = #tpu.pipeline_mode<synchronous>, transform_indices = @transform_1, window_bounds = array<i64: 32, 128>}, {pipeline_mode = #tpu.pipeline_mode<synchronous>, transform_indices = @transform_2, window_bounds = array<i64: 1, 128>}, {pipeline_mode = #tpu.pipeline_mode<synchronous>, transform_indices = @transform_3, window_bounds = array<i64: 128, 128>}, {pipeline_mode = #tpu.pipeline_mode<synchronous>, transform_indices = @transform_4, window_bounds = array<i64: 1, 128>}, {transform_indices = @transform_5, window_bounds = array<i64: 8, 128>}]} {
    %c0 = arith.constant 0 : index
    %c0_0 = arith.constant 0 : index
    %0 = vector.load %arg1[%c0, %c0_0] : memref<8x32xf32, #tpu.memory_space<vmem>>, vector<8x32xf32>
    %c0_1 = arith.constant 0 : index
    %c0_2 = arith.constant 0 : index
    %1 = vector.load %arg2[%c0_1, %c0_2] : memref<32x128xf32, #tpu.memory_space<vmem>>, vector<32x128xf32>
    %cst = arith.constant dense<0.000000e+00> : vector<8x128xf32>
    %2 = tpu.matmul %0, %1, %cst {dimension_numbers = #tpu.dot_dimension_numbers<[1], [0], [0], [1], [0, 0, 1, 1], [], []>} : vector<8x32xf32>, vector<32x128xf32>, vector<8x128xf32> -> vector<8x128xf32>
    %c0_3 = arith.constant 0 : index
    %c0_4 = arith.constant 0 : index
    %3 = vector.load %arg3[%c0_3, %c0_4] : memref<1x128xf32, #tpu.memory_space<vmem>>, vector<1x128xf32>
    %4 = vector.broadcast %3 : vector<1x128xf32> to vector<8x128xf32>
    %5 = arith.addf %2, %4 : vector<8x128xf32>
    %cst_5 = arith.constant 0.000000e+00 : f32
    %6 = vector.broadcast %cst_5 : f32 to vector<8x128xf32>
    %7 = arith.maximumf %5, %6 : vector<8x128xf32>
    %c0_6 = arith.constant 0 : index
    %c0_7 = arith.constant 0 : index
    %8 = vector.load %arg4[%c0_6, %c0_7] : memref<128x128xf32, #tpu.memory_space<vmem>>, vector<128x128xf32>
    %cst_8 = arith.constant dense<0.000000e+00> : vector<8x128xf32>
    %9 = tpu.matmul %7, %8, %cst_8 {dimension_numbers = #tpu.dot_dimension_numbers<[1], [0], [0], [1], [0, 0, 1, 1], [], []>} : vector<8x128xf32>, vector<128x128xf32>, vector<8x128xf32> -> vector<8x128xf32>
    %c0_9 = arith.constant 0 : index
    %c0_10 = arith.constant 0 : index
    %10 = vector.load %arg5[%c0_9, %c0_10] : memref<1x128xf32, #tpu.memory_space<vmem>>, vector<1x128xf32>
    %11 = vector.broadcast %10 : vector<1x128xf32> to vector<8x128xf32>
    %12 = arith.addf %9, %11 : vector<8x128xf32>
    %c0_11 = arith.constant 0 : index
    %c0_12 = arith.constant 0 : index
    %13 = vector.load %arg6[%c0_11, %c0_12] : memref<8x128xf32, #tpu.memory_space<vmem>>, vector<8x128xf32>
    tpu.vector_store %arg6[%c0_11, %c0_12], %12 {strides = array<i32>} : memref<8x128xf32, #tpu.memory_space<vmem>>, vector<8x128xf32>,
    return
  }
  func.func @transform_0(%arg0: i32) -> (i32, i32) {
    %c0_i32 = arith.constant 0 : i32
    %c0_i32_0 = arith.constant 0 : i32
    return %arg0, %c0_i32 : i32, i32
  }
  func.func @transform_1(%arg0: i32) -> (i32, i32) {
    %c0_i32 = arith.constant 0 : i32
    %c0_i32_0 = arith.constant 0 : i32
    %c0_i32_1 = arith.constant 0 : i32
    return %c0_i32, %c0_i32_0 : i32, i32
  }
  func.func @transform_2(%arg0: i32) -> (i32, i32) {
    %c0_i32 = arith.constant 0 : i32
    %c0_i32_0 = arith.constant 0 : i32
    %c0_i32_1 = arith.constant 0 : i32
    return %c0_i32, %c0_i32_0 : i32, i32
  }
  func.func @transform_3(%arg0: i32) -> (i32, i32) {
    %c0_i32 = arith.constant 0 : i32
    %c0_i32_0 = arith.constant 0 : i32
    %c0_i32_1 = arith.constant 0 : i32
    return %c0_i32, %c0_i32_0 : i32, i32
  }
  func.func @transform_4(%arg0: i32) -> (i32, i32) {
    %c0_i32 = arith.constant 0 : i32
    %c0_i32_0 = arith.constant 0 : i32
    %c0_i32_1 = arith.constant 0 : i32
    return %c0_i32, %c0_i32_0 : i32, i32
  }
  func.func @transform_5(%arg0: i32) -> (i32, i32) {
    %c0_i32 = arith.constant 0 : i32
    %c0_i32_0 = arith.constant 0 : i32
    return %arg0, %c0_i32 : i32, i32
  }
}

</mosaic_0001>

<llo_original>
// kernel: tpu_custom_call.1
$region0: #{tpu_custom_call.1}
  #allocation0 [shape = 'u32[]', space=smem, size = 0x4, offset = 0x4, fixed_abs, tag = 'smem constant byte address 0x4 - core index']
  #allocation1 [shape = 'u32[144,128]{1,0:T(1,128)}', space=vmem, size = 0x12000, scoped, tag = 'internal scratch']
  %s0 = inlined_call_operand.hbm [shape: f32[16,32], index: 0, kind: input, shape index: {}]
  %s1 = inlined_call_operand.hbm [shape: f32[32,128], index: 1, kind: input, shape index: {}]
  %s2 = inlined_call_operand.vmem [shape: f32[1,128], index: 2, kind: input, shape index: {}]
  %s3 = inlined_call_operand.hbm [shape: f32[128,128], index: 3, kind: input, shape index: {}]
  %s4 = inlined_call_operand.vmem [shape: f32[1,128], index: 4, kind: input, shape index: {}]
  %s5 = inlined_call_operand.hbm [shape: f32[16,128], index: 5, kind: output, shape index: {}]
  %s6 = sld [smem:[#allocation0]]
  $region65: #{tpu_custom_call.1} parent=0
    _
  %s8 = ssub.s32 1, %s6
  %s9 = scalar_select 0, %s8, %s6
  $region1: #{tpu_custom_call.1} parent=0
    #allocation2 [shape = 'u8[8192]{0}', space=vmem, size = 0x2000, scoped, tag = 'input window, operand 0']
    #allocation3 [shape = 's32[2]{0}', space=sflag, size = 0x8, scoped, tag = 'scoped memory for tpu_custom_call.1']
    #allocation4 [shape = 's32[2]{0}', space=sflag, size = 0x8, scoped, tag = 'scoped memory for tpu_custom_call.1']
    #allocation5 [shape = 'u8[16384]{0}', space=vmem, size = 0x4000, scoped, tag = 'input window, operand 1, single buffered']
    #allocation6 [shape = 's32[1]{0}', space=sflag, size = 0x4, scoped, tag = 'scoped memory for tpu_custom_call.1']
    #allocation7 [shape = 'u8[65536]{0}', space=vmem, size = 0x10000, scoped, tag = 'input window, operand 3, single buffered']
    #allocation8 [shape = 'u8[8192]{0}', space=vmem, size = 0x2000, scoped, tag = 'output window, operand 0']
    %10 = vsyncpa [#allocation3], 0
    %s11 = scalar_lea.sflag [#allocation3], 1
    %12 = vsyncpa %s11, 0
    %13 = vsyncpa [#allocation6], 0
    %14 = vsyncpa [#allocation4], 0
    %s15 = scalar_lea.sflag [#allocation4], 1
    %16 = vsyncpa %s15, 0
    loop: start=0, step=1, limit=4
    $region2: #{tpu_custom_call.1} parent=1 // loop_pre_header
      _
    $region3: #{tpu_custom_call.1} parent=1 // loop_header
      %s18 = sphi 0, %s22
      %p19 = scmp.ge.s32.totalorder %s18, 4
      %s28 = sphi 0, %s30
      %s31 = sphi 0, %s28
      %s32 = sphi 0, %s31
      %s48 = sphi 0, %s32
      %s52 = sphi 0, %s52
      %s54 = sphi 0, %s52
      %s55 = sphi 0, %s54
      %s69 = sphi 0, %s55
      %s73 = sphi 0, %s73
      %s75 = sphi 0, %s73
      %s76 = sphi 0, %s75
      %s90 = sphi 0, %s76
      %s94 = sphi 0, %s94
      %s96 = sphi 0, %s94
      %s97 = sphi 0, %s96
      %s111 = sphi 0, %s97
      %s115 = sphi 0, %s115
      %s117 = sphi 0, %s115
      %s118 = sphi 0, %s117
      %s132 = sphi 0, %s118
      %s138 = sphi 0, %s140
      %s141 = sphi 0, %s138
      %s142 = sphi 0, %s141
      %s158 = sphi 0, %s142
    $region4: #{tpu_custom_call.1} parent=1 // loop_header_branch
      %21 = sbr.rel (%p19) target = $region8
    $region5: #{tpu_custom_call.1} parent=1 // loop_body
      %s23 = ssub.s32 %s18, 1
      %s24 = ssub.s32 %s18, 2
      %s25 = sadd.s32 %s18, 1
      %s26 = ssub.s32 %s18, %s25
      %p27 = scmp.eq.s32.totalorder %s26, 0
      %s29 = sadd.s32 %s28, 1
      %s30 = scalar_select %p27, %s28, %s29
      %p33 = pneg %p27
      %p34 = scmp.eq.s32.totalorder %s18, 1
      %p35 = por %p33, %p34
      %p36 = scmp.ne.s32.totalorder %s28, %s31
      %p37 = scmp.eq.s32.totalorder %s18, 0
      %p38 = por %p36, %p37
      %p39 = scmp.ne.s32.totalorder %s28, %s31
      %p40 = scmp.eq.s32.totalorder %s23, 1
      %p41 = por %p39, %p40
      %p42 = scmp.ne.s32.totalorder %s31, %s32
      %p43 = scmp.eq.s32.totalorder %s23, 0
      %p44 = por %p42, %p43
      %p45 = scmp.ne.s32.totalorder %s31, %s32
      %p46 = scmp.eq.s32.totalorder %s24, 1
      %p47 = por %p45, %p46
      %p49 = scmp.ne.s32.totalorder %s32, %s48
      %p50 = scmp.eq.s32.totalorder %s24, 0
      %p51 = por %p49, %p50
      %s53 = sadd.s32 %s52, 1
      %p56 = scmp.eq.s32.totalorder %s18, 1
      %p57 = scmp.ne.s32.totalorder %s52, %s54
      %p58 = scmp.eq.s32.totalorder %s18, 0
      %p59 = por %p57, %p58
      %p60 = scmp.ne.s32.totalorder %s52, %s54
      %p61 = scmp.eq.s32.totalorder %s23, 1
      %p62 = por %p60, %p61
      %p63 = scmp.ne.s32.totalorder %s54, %s55
      %p64 = scmp.eq.s32.totalorder %s23, 0
      %p65 = por %p63, %p64
      %p66 = scmp.ne.s32.totalorder %s54, %s55
      %p67 = scmp.eq.s32.totalorder %s24, 1
      %p68 = por %p66, %p67
      %p70 = scmp.ne.s32.totalorder %s55, %s69
      %p71 = scmp.eq.s32.totalorder %s24, 0
      %p72 = por %p70, %p71
      %s74 = sadd.s32 %s73, 1
      %p77 = scmp.eq.s32.totalorder %s18, 1
      %p78 = scmp.ne.s32.totalorder %s73, %s75
      %p79 = scmp.eq.s32.totalorder %s18, 0
      %p80 = por %p78, %p79
      %p81 = scmp.ne.s32.totalorder %s73, %s75
      %p82 = scmp.eq.s32.totalorder %s23, 1
      %p83 = por %p81, %p82
      %p84 = scmp.ne.s32.totalorder %s75, %s76
      %p85 = scmp.eq.s32.totalorder %s23, 0
      %p86 = por %p84, %p85
      %p87 = scmp.ne.s32.totalorder %s75, %s76
      %p88 = scmp.eq.s32.totalorder %s24, 1
      %p89 = por %p87, %p88
      %p91 = scmp.ne.s32.totalorder %s76, %s90
      %p92 = scmp.eq.s32.totalorder %s24, 0
      %p93 = por %p91, %p92
      %s95 = sadd.s32 %s94, 1
      %p98 = scmp.eq.s32.totalorder %s18, 1
      %p99 = scmp.ne.s32.totalorder %s94, %s96
      %p100 = scmp.eq.s32.totalorder %s18, 0
      %p101 = por %p99, %p100
      %p102 = scmp.ne.s32.totalorder %s94, %s96
      %p103 = scmp.eq.s32.totalorder %s23, 1
      %p104 = por %p102, %p103
      %p105 = scmp.ne.s32.totalorder %s96, %s97
      %p106 = scmp.eq.s32.totalorder %s23, 0
      %p107 = por %p105, %p106
      %p108 = scmp.ne.s32.totalorder %s96, %s97
      %p109 = scmp.eq.s32.totalorder %s24, 1
      %p110 = por %p108, %p109
      %p112 = scmp.ne.s32.totalorder %s97, %s111
      %p113 = scmp.eq.s32.totalorder %s24, 0
      %p114 = por %p112, %p113
      %s116 = sadd.s32 %s115, 1
      %p119 = scmp.eq.s32.totalorder %s18, 1
      %p120 = scmp.ne.s32.totalorder %s115, %s117
      %p121 = scmp.eq.s32.totalorder %s18, 0
      %p122 = por %p120, %p121
      %p123 = scmp.ne.s32.totalorder %s115, %s117
      %p124 = scmp.eq.s32.totalorder %s23, 1
      %p125 = por %p123, %p124
      %p126 = scmp.ne.s32.totalorder %s117, %s118
      %p127 = scmp.eq.s32.totalorder %s23, 0
      %p128 = por %p126, %p127
      %p129 = scmp.ne.s32.totalorder %s117, %s118
      %p130 = scmp.eq.s32.totalorder %s24, 1
      %p131 = por %p129, %p130
      %p133 = scmp.ne.s32.totalorder %s118, %s132
      %p134 = scmp.eq.s32.totalorder %s24, 0
      %p135 = por %p133, %p134
      %s136 = ssub.s32 %s18, %s25
      %p137 = scmp.eq.s32.totalorder %s136, 0
      %s139 = sadd.s32 %s138, 1
      %s140 = scalar_select %p137, %s138, %s139
      %p143 = pneg %p137
      %p144 = scmp.eq.s32.totalorder %s18, 1
      %p145 = por %p143, %p144
      %p146 = scmp.ne.s32.totalorder %s138, %s141
      %p147 = scmp.eq.s32.totalorder %s18, 0
      %p148 = por %p146, %p147
      %p149 = scmp.ne.s32.totalorder %s138, %s141
      %p150 = scmp.eq.s32.totalorder %s23, 1
      %p151 = por %p149, %p150
      %p152 = scmp.ne.s32.totalorder %s141, %s142
      %p153 = scmp.eq.s32.totalorder %s23, 0
      %p154 = por %p152, %p153
      %p155 = scmp.ne.s32.totalorder %s141, %s142
      %p156 = scmp.eq.s32.totalorder %s24, 1
      %p157 = por %p155, %p156
      %p159 = scmp.ne.s32.totalorder %s142, %s158
      %p160 = scmp.eq.s32.totalorder %s24, 0
      %p161 = por %p159, %p160
      %p162 = scmp.le.s32.totalorder 1, %s18
      %p163 = scmp.lt.s32.totalorder %s18, 3
      %p164 = pnand %p162, %p163
      %p165 = pneg %p164
      // Predicated region
      $region9: #{tpu_custom_call.1} parent=5 // pred_check
        _
      $region10: #{tpu_custom_call.1} parent=5 // pred_check_branch
        %167 = sbr.rel (%p164) target = $region12
      $region11: #{tpu_custom_call.1} parent=5 // pred_region
        %s168 = ssub.s32 %s18, 1
        // Predicated region
        $region13: #{tpu_custom_call.1} parent=11 // pred_check
          %p169 = pneg %p65
        $region14: #{tpu_custom_call.1} parent=11 // pred_check_branch
          %171 = sbr.rel (%p169) target = $region16
        $region15: #{tpu_custom_call.1} parent=11 // pred_region
          %s173 = ssub.s32 512, 512
          %174 = vsyncadd [#allocation6], %s173
          %s175 = sshll.u32 [#allocation5], 4
          %s176 = int_to_ptr.vmem [resolvable:$true] %s175
          %181 = dma.hbm_to_vmem [thread:$0]  %s1, 512, %s176, [#allocation6], 128, 128, 8
        $region16: #{tpu_custom_call.1} parent=11 // pred_fallthru
          _
        // Predicated region
        $region17: #{tpu_custom_call.1} parent=11 // pred_check
          %p182 = pneg %p86
        $region18: #{tpu_custom_call.1} parent=11 // pred_check_branch
          %184 = sbr.rel (%p182) target = $region20
        $region19: #{tpu_custom_call.1} parent=11 // pred_region
          _
        $region20: #{tpu_custom_call.1} parent=11 // pred_fallthru
          _
        // Predicated region
        $region21: #{tpu_custom_call.1} parent=11 // pred_check
          %p185 = pneg %p107
        $region22: #{tpu_custom_call.1} parent=11 // pred_check_branch
          %187 = sbr.rel (%p185) target = $region24
        $region23: #{tpu_custom_call.1} parent=11 // pred_region
          %s189 = ssub.s32 2048, 2048
          %190 = vsyncadd [#allocation6], %s189
          %s191 = sshll.u32 [#allocation7], 4
          %s192 = int_to_ptr.vmem [resolvable:$true] %s191
          %197 = dma.hbm_to_vmem [thread:$0]  %s3, 2048, %s192, [#allocation6], 128, 128, 8
        $region24: #{tpu_custom_call.1} parent=11 // pred_fallthru
          _
        // Predicated region
        $region25: #{tpu_custom_call.1} parent=11 // pred_check
          %p198 = pneg %p128
        $region26: #{tpu_custom_call.1} parent=11 // pred_check_branch
          %200 = sbr.rel (%p198) target = $region28
        $region27: #{tpu_custom_call.1} parent=11 // pred_region
          _
        $region28: #{tpu_custom_call.1} parent=11 // pred_fallthru
          _
      $region12: #{tpu_custom_call.1} parent=5 // pred_fallthru
        _
      %p201 = scmp.lt.s32.totalorder %s18, 2
      // Predicated region
      $region29: #{tpu_custom_call.1} parent=5 // pred_check
        %p202 = pneg %p201
      $region30: #{tpu_custom_call.1} parent=5 // pred_check_branch
        %204 = sbr.rel (%p202) target = $region32
      $region31: #{tpu_custom_call.1} parent=5 // pred_region
        // Predicated region
        $region33: #{tpu_custom_call.1} parent=31 // pred_check
          %p205 = pneg %p38
        $region34: #{tpu_custom_call.1} parent=31 // pred_check_branch
          %207 = sbr.rel (%p205) target = $region36
        $region35: #{tpu_custom_call.1} parent=31 // pred_region
          %s208 = sand.u32 %s28, 1
          %s209 = scalar_lea.sflag [#allocation3], %s208
          %s210 = sand.u32 %s28, 1
          %s211 = smul.addr %s210, 8
          %s212 = scalar_lea.vmem [#allocation2], %s211
          %s214 = ssub.s32 128, 128
          %215 = vsyncadd %s209, %s214
          %s216 = smul.addr %s18, 128
          %s217 = scalar_lea.hbm %s0, %s216
          %s219 = sshll.u32 %s212, 4
          %s220 = int_to_ptr.vmem [resolvable:$true] %s219
          %222 = dma.hbm_to_vmem [thread:$0]  %s217, 128, %s220, %s209
        $region36: #{tpu_custom_call.1} parent=31 // pred_fallthru
          _
      $region32: #{tpu_custom_call.1} parent=5 // pred_fallthru
        _
      %p223 = scmp.le.s32.totalorder 1, %s18
      %p224 = scmp.lt.s32.totalorder %s18, 3
      %p225 = pnand %p223, %p224
      %p226 = pneg %p225
      // Predicated region
      $region37: #{tpu_custom_call.1} parent=5 // pred_check
        _
      $region38: #{tpu_custom_call.1} parent=5 // pred_check_branch
        %228 = sbr.rel (%p225) target = $region40
      $region39: #{tpu_custom_call.1} parent=5 // pred_region
        %s229 = ssub.s32 %s18, 1
        %s230 = sand.u32 %s31, 1
        %s231 = scalar_lea.sflag [#allocation3], %s230
        %s232 = sand.u32 %s31, 1
        %s233 = smul.addr %s232, 8
        %s234 = scalar_lea.vmem [#allocation2], %s233
        // Predicated region
        $region41: #{tpu_custom_call.1} parent=39 // pred_check
          %p235 = pneg %p44
        $region42: #{tpu_custom_call.1} parent=39 // pred_check_branch
          %237 = sbr.rel (%p235) target = $region44
        $region43: #{tpu_custom_call.1} parent=39 // pred_region
          %238 = dma.done %s231, 128
        $region44: #{tpu_custom_call.1} parent=39 // pred_fallthru
          _
        // Predicated region
        $region45: #{tpu_custom_call.1} parent=39 // pred_check
          %p239 = pneg %p65
        $region46: #{tpu_custom_call.1} parent=39 // pred_check_branch
          %241 = sbr.rel (%p239) target = $region48
        $region47: #{tpu_custom_call.1} parent=39 // pred_region
          %242 = dma.done [#allocation6], 512
        $region48: #{tpu_custom_call.1} parent=39 // pred_fallthru
          _
        // Predicated region
        $region49: #{tpu_custom_call.1} parent=39 // pred_check
          %p243 = pneg %p107
        $region50: #{tpu_custom_call.1} parent=39 // pred_check_branch
          %245 = sbr.rel (%p243) target = $region52
        $region51: #{tpu_custom_call.1} parent=39 // pred_region
          %246 = dma.done [#allocation6], 2048
        $region52: #{tpu_custom_call.1} parent=39 // pred_fallthru
          _
        %s247 = sand.u32 %s31, 1
        %s248 = scalar_lea.sflag [#allocation3], %s247
        %s249 = sand.u32 %s31, 1
        %s250 = smul.addr %s249, 8
        %s251 = scalar_lea.vmem [#allocation2], %s250
        %p252 = pneg %p44
        %p253 = pneg %p41
        %p254 = pneg %p65
        %p255 = pneg %p62
        %p256 = pneg %p86
        %p257 = pneg %p83
        %p258 = pneg %p107
        %p259 = pneg %p104
        %p260 = pneg %p128
        %p261 = pneg %p125
        %p262 = pneg %p154
        %p263 = pneg %p151
        %s264 = sand.u32 %s141, 1
        %s265 = scalar_lea.sflag [#allocation4], %s264
        %s266 = sand.u32 %s141, 1
        %s267 = smul.addr %s266, 8
        %s268 = scalar_lea.vmem [#allocation8], %s267
        %v269 = vld [vmem:[%s234] sm:$0xff]
        %v270 = vld [vmem:[#allocation5] sm:$0xff]
        %v271 = vld [vmem:[#allocation5 + $0x8] sm:$0xff]
        %v272 = vld [vmem:[#allocation5 + $0x10] sm:$0xff]
        %v273 = vld [vmem:[#allocation5 + $0x18] sm:$0xff]
        %v274 = vld [vmem:[%s2] sm:$0x1]
        %v276 = vlaneseq
        %v277 = vshrl.u32 %v276, 7
        %v278 = vsub.s32 0, %v277
        %v279 = vrot.slane %v274, %v278
        %vm281 = vcmask 261120
        %v283 = vsel %vm281, %v269, 0
        %285 = vmatprep.subr.mxu0 0.0
        %286 = vmatpush1.msra.mxu0 %v270
        %287 = vmatprep.subr.mxu0 0.0
        %288 = vmatpush1.msra.mxu0 %v271
        %289 = vmatprep.subr.mxu0 0.0
        %290 = vmatpush1.msra.mxu0 %v272
        %291 = vmatprep.subr.mxu0 0.0
        %292 = vmatpush1.msra.mxu0 %v273
        %293 = vmatprep.subr.mxu0 0.0
        %294 = vmatpush1.msra.mxu0 0.0
        %295 = vmatprep.subr.mxu0 0.0
        %296 = vmatpush1.msra.mxu0 0.0
        %297 = vmatprep.subr.mxu0 0.0
        %298 = vmatpush1.msra.mxu0 0.0
        %299 = vmatprep.subr.mxu0 0.0
        %300 = vmatpush1.msra.mxu0 0.0
        %301 = vmatprep.subr.mxu0 0.0
        %302 = vmatpush1.msra.mxu0 0.0
        %303 = vmatprep.subr.mxu0 0.0
        %304 = vmatpush1.msra.mxu0 0.0
        %305 = vmatprep.subr.mxu0 0.0
        %306 = vmatpush1.msra.mxu0 0.0
        %307 = vmatprep.subr.mxu0 0.0
        %308 = vmatpush1.msra.mxu0 0.0
        %309 = vmatprep.subr.mxu0 0.0
        %310 = vmatpush1.msra.mxu0 0.0
        %311 = vmatprep.subr.mxu0 0.0
        %312 = vmatpush1.msra.mxu0 0.0
        %313 = vmatprep.subr.mxu0 0.0
        %314 = vmatpush1.msra.mxu0 0.0
        %315 = vmatprep.subr.mxu0 0.0
        %316 = vmatpush1.msra.mxu0 0.0
        %317 = vmatprep.subr.mxu0 0.0
        %318 = vmatpush1.msra.mxu0 0.0
        %319 = vmatprep.subr.mxu0 0.0
        %320 = vmatpush1.msra.mxu0 0.0
        %321 = vmatprep.subr.mxu0 0.0
        %322 = vmatpush1.msra.mxu0 0.0
        %323 = vmatprep.subr.mxu0 0.0
        %324 = vmatpush1.msra.mxu0 0.0
        %325 = vmatprep.subr.mxu0 0.0
        %326 = vmatpush1.msra.mxu0 0.0
        %327 = vmatprep.subr.mxu0 0.0
        %328 = vmatpush1.msra.mxu0 0.0
        %329 = vmatprep.subr.mxu0 0.0
        %330 = vmatpush1.msra.mxu0 0.0
        %331 = vmatprep.subr.mxu0 0.0
        %332 = vmatpush1.msra.mxu0 0.0
        %333 = vmatprep.subr.mxu0 0.0
        %334 = vmatpush1.msra.mxu0 0.0
        %335 = vmatprep.subr.mxu0 0.0
        %336 = vmatpush1.msra.mxu0 0.0
        %337 = vmatprep.subr.mxu0 0.0
        %338 = vmatpush1.msra.mxu0 0.0
        %339 = vmatprep.subr.mxu0 0.0
        %340 = vmatpush1.msra.mxu0 0.0
        %341 = vmatprep.subr.mxu0 0.0
        %342 = vmatpush1.msra.mxu0 0.0
        %343 = vmatprep.subr.mxu0 0.0
        %344 = vmatpush1.msra.mxu0 0.0
        %345 = vmatprep.subr.mxu0 0.0
        %346 = vmatpush1.msra.mxu0 0.0
        %347 = vmatprep.subr.mxu0 0.0
        %348 = vmatpush1.msra.mxu0 0.0
        %349 = vmatprep.mubr.f32.mxu0 0.0
        %350 = vmatmul.mubr.f32.gmra.mrb[0].mxu0 %v283
        %v351 = vpop.f32.mrb[0].mxu0
        %v352 = vadd.f32 %v279, %v351
        %v353 = vpop.f32.mrb[0].mxu0
        %354 = vdwg.mxu0
        %v355 = vmax.f32 %v352, 0.0
        %v356 = vld [vmem:[#allocation7] sm:$0xff]
        %v357 = vld [vmem:[#allocation7 + $0x8] sm:$0xff]
        %v358 = vld [vmem:[#allocation7 + $0x10] sm:$0xff]
        %v359 = vld [vmem:[#allocation7 + $0x18] sm:$0xff]
        %v360 = vld [vmem:[#allocation7 + $0x20] sm:$0xff]
        %v361 = vld [vmem:[#allocation7 + $0x28] sm:$0xff]
        %v362 = vld [vmem:[#allocation7 + $0x30] sm:$0xff]
        %v363 = vld [vmem:[#allocation7 + $0x38] sm:$0xff]
        %v364 = vld [vmem:[#allocation7 + $0x40] sm:$0xff]
        %v365 = vld [vmem:[#allocation7 + $0x48] sm:$0xff]
        %v366 = vld [vmem:[#allocation7 + $0x50] sm:$0xff]
        %v367 = vld [vmem:[#allocation7 + $0x58] sm:$0xff]
        %v368 = vld [vmem:[#allocation7 + $0x60] sm:$0xff]
        %v369 = vld [vmem:[#allocation7 + $0x68] sm:$0xff]
        %v370 = vld [vmem:[#allocation7 + $0x70] sm:$0xff]
        %v371 = vld [vmem:[#allocation7 + $0x78] sm:$0xff]
        %v372 = vld [vmem:[%s4] sm:$0x1]
        %v374 = vlaneseq
        %v375 = vshrl.u32 %v374, 7
        %v376 = vsub.s32 0, %v375
        %v377 = vrot.slane %v372, %v376
        %379 = vmatprep.subr.mxu0 0.0
        %380 = vmatpush1.msra.mxu0 %v356
        %381 = vmatprep.subr.mxu0 0.0
        %382 = vmatpush1.msra.mxu0 %v357
        %383 = vmatprep.subr.mxu0 0.0
        %384 = vmatpush1.msra.mxu0 %v358
        %385 = vmatprep.subr.mxu0 0.0
        %386 = vmatpush1.msra.mxu0 %v359
        %387 = vmatprep.subr.mxu0 0.0
        %388 = vmatpush1.msra.mxu0 %v360
        %389 = vmatprep.subr.mxu0 0.0
        %390 = vmatpush1.msra.mxu0 %v361
        %391 = vmatprep.subr.mxu0 0.0
        %392 = vmatpush1.msra.mxu0 %v362
        %393 = vmatprep.subr.mxu0 0.0
        %394 = vmatpush1.msra.mxu0 %v363
        %395 = vmatprep.subr.mxu0 0.0
        %396 = vmatpush1.msra.mxu0 %v364
        %397 = vmatprep.subr.mxu0 0.0
        %398 = vmatpush1.msra.mxu0 %v365
        %399 = vmatprep.subr.mxu0 0.0
        %400 = vmatpush1.msra.mxu0 %v366
        %401 = vmatprep.subr.mxu0 0.0
        %402 = vmatpush1.msra.mxu0 %v367
        %403 = vmatprep.subr.mxu0 0.0
        %404 = vmatpush1.msra.mxu0 %v368
        %405 = vmatprep.subr.mxu0 0.0
        %406 = vmatpush1.msra.mxu0 %v369
        %407 = vmatprep.subr.mxu0 0.0
        %408 = vmatpush1.msra.mxu0 %v370
        %409 = vmatprep.subr.mxu0 0.0
        %410 = vmatpush1.msra.mxu0 %v371
        %411 = vmatprep.subr.mxu0 0.0
        %412 = vmatpush1.msra.mxu0 0.0
        %413 = vmatprep.subr.mxu0 0.0
        %414 = vmatpush1.msra.mxu0 0.0
        %415 = vmatprep.subr.mxu0 0.0
        %416 = vmatpush1.msra.mxu0 0.0
        %417 = vmatprep.subr.mxu0 0.0
        %418 = vmatpush1.msra.mxu0 0.0
        %419 = vmatprep.subr.mxu0 0.0
        %420 = vmatpush1.msra.mxu0 0.0
        %421 = vmatprep.subr.mxu0 0.0
        %422 = vmatpush1.msra.mxu0 0.0
        %423 = vmatprep.subr.mxu0 0.0
        %424 = vmatpush1.msra.mxu0 0.0
        %425 = vmatprep.subr.mxu0 0.0
        %426 = vmatpush1.msra.mxu0 0.0
        %427 = vmatprep.subr.mxu0 0.0
        %428 = vmatpush1.msra.mxu0 0.0
        %429 = vmatprep.subr.mxu0 0.0
        %430 = vmatpush1.msra.mxu0 0.0
        %431 = vmatprep.subr.mxu0 0.0
        %432 = vmatpush1.msra.mxu0 0.0
        %433 = vmatprep.subr.mxu0 0.0
        %434 = vmatpush1.msra.mxu0 0.0
        %435 = vmatprep.subr.mxu0 0.0
        %436 = vmatpush1.msra.mxu0 0.0
        %437 = vmatprep.subr.mxu0 0.0
        %438 = vmatpush1.msra.mxu0 0.0
        %439 = vmatprep.subr.mxu0 0.0
        %440 = vmatpush1.msra.mxu0 0.0
        %441 = vmatprep.subr.mxu0 0.0
        %442 = vmatpush1.msra.mxu0 0.0
        %443 = vmatprep.mubr.f32.mxu0 0.0
        %444 = vmatmul.mubr.f32.gmra.mrb[0].mxu0 %v355
        %v445 = vpop.f32.mrb[0].mxu0
        %v446 = vadd.f32 %v377, %v445
        %v447 = vpop.f32.mrb[0].mxu0
        %448 = vdwg.mxu0
        %449 = vst [vmem:[%s268] sm:$0xff] %v446
        %s450 = sand.u32 %s141, 1
        %s451 = scalar_lea.sflag [#allocation4], %s450
        %s452 = sand.u32 %s141, 1
        %s453 = smul.addr %s452, 8
        %s454 = scalar_lea.vmem [#allocation8], %s453
        // Predicated region
        $region53: #{tpu_custom_call.1} parent=39 // pred_check
          %p455 = pneg %p151
        $region54: #{tpu_custom_call.1} parent=39 // pred_check_branch
          %457 = sbr.rel (%p455) target = $region56
        $region55: #{tpu_custom_call.1} parent=39 // pred_region
          %s459 = ssub.s32 128, 128
          %460 = vsyncadd %s451, %s459
          %s461 = smul.addr %s23, 128
          %s462 = scalar_lea.hbm %s5, %s461
          %s464 = sshll.u32 %s454, 4
          %s465 = int_to_ptr.vmem [resolvable:$true] %s464
          %467 = dma.vmem_to_hbm [thread:$0]  %s465, 128, %s462, %s451
        $region56: #{tpu_custom_call.1} parent=39 // pred_fallthru
          _
      $region40: #{tpu_custom_call.1} parent=5 // pred_fallthru
        _
      %p468 = scmp.le.s32.totalorder 2, %s18
      // Predicated region
      $region57: #{tpu_custom_call.1} parent=5 // pred_check
        %p469 = pneg %p468
      $region58: #{tpu_custom_call.1} parent=5 // pred_check_branch
        %471 = sbr.rel (%p469) target = $region60
      $region59: #{tpu_custom_call.1} parent=5 // pred_region
        %s472 = ssub.s32 %s18, 2
        // Predicated region
        $region61: #{tpu_custom_call.1} parent=59 // pred_check
          %p473 = pneg %p157
        $region62: #{tpu_custom_call.1} parent=59 // pred_check_branch
          %475 = sbr.rel (%p473) target = $region64
        $region63: #{tpu_custom_call.1} parent=59 // pred_region
          %s476 = sand.u32 %s142, 1
          %s477 = scalar_lea.sflag [#allocation4], %s476
          %s478 = sand.u32 %s142, 1
          %s479 = smul.addr %s478, 8
          %s480 = scalar_lea.vmem [#allocation8], %s479
          %481 = dma.done %s477, 128
        $region64: #{tpu_custom_call.1} parent=59 // pred_fallthru
          _
      $region60: #{tpu_custom_call.1} parent=5 // pred_fallthru
        _
    $region6: #{tpu_custom_call.1} parent=1 // loop_footer
      %s22 = sadd.s32 1, %s18
    $region7: #{tpu_custom_call.1} parent=1 // loop_footer_branch
      %17 = sbr.rel target = $region3
    $region8: #{tpu_custom_call.1} parent=1 // loop_exit
      _
    %482 = vsyncpa [#allocation3], 1
    %s483 = scalar_lea.sflag [#allocation3], 1
    %484 = vsyncpa %s483, 1
    %485 = vsyncpa [#allocation6], 1
    %486 = vsyncpa [#allocation4], 1
    %s487 = scalar_lea.sflag [#allocation4], 1
    %488 = vsyncpa %s487, 1

</llo_original>
